<compile_context>
chip_gen: v7x
topology: tpu7x:2x2x1
jax: 0.10.0
libtpu: 0.0.40
codegen_flags: <defaults>
</compile_context>

<pallas_src>
import functools

import jax
import jax.numpy as jnp
from jax.experimental import pallas as pl
from jax.experimental.pallas import tpu as pltpu


# ---------------------------------------------------------------------------
# Kernels
# ---------------------------------------------------------------------------
def _nonneg_kernel(x_ref, o_ref, *, bound, pedestal):
    """Elementwise: out = max(x, bound)**2 - pedestal (math in f32)."""
    x = x_ref[...].astype(jnp.float32)          # in-register upcast (VPU, free)
    y = jnp.maximum(x, jnp.float32(bound))
    o_ref[...] = (y * y - jnp.float32(pedestal)).astype(o_ref.dtype)


def _gdn_reparam_kernel(beta_ref, gamma_ref, beta_out_ref, gamma_out_ref, *,
                        beta_bound, gamma_bound, pedestal):
    """Fused reparametrization of one GDN layer's beta and gamma."""
    b = beta_ref[...].astype(jnp.float32)
    g = gamma_ref[...].astype(jnp.float32)
    yb = jnp.maximum(b, jnp.float32(beta_bound))
    yg = jnp.maximum(g, jnp.float32(gamma_bound))
    beta_out_ref[...] = (yb * yb - jnp.float32(pedestal)).astype(beta_out_ref.dtype)
    gamma_out_ref[...] = (yg * yg - jnp.float32(pedestal)).astype(gamma_out_ref.dtype)


# ---------------------------------------------------------------------------
# Wrappers
# ---------------------------------------------------------------------------
def non_negative_parametrizer(x, *, minimum=0.0, reparam_offset=2.0 ** (-18),
                              block_rows=1024):
    """General Pallas implementation of NonNegativeParametrizer.forward.

    Works for any shape/dtype; output dtype == input dtype (math in f32).
    """
    pedestal = float(reparam_offset) ** 2
    bound = (float(minimum) + pedestal) ** 0.5

    orig_shape = x.shape
    dtype = x.dtype
    lanes = 128

    total = x.size
    flat = x.reshape(-1)
    pad = (-total) % lanes
    if pad:
        # Rare unaligned case only: one padded copy so the slab is lane-dense.
        flat = jnp.pad(flat, (0, pad))
    rows = flat.size // lanes
    x2d = flat.reshape(rows, lanes)

    if rows <= block_rows:
        br = rows                     # single block == full array dims (legal)
        grid = (1,)
    else:
        br = block_rows               # multiple of 8 & 16 -> (8,128)/(16,128) ok
        grid = (pl.cdiv(rows, br),)   # non-dividing edge block masked by Pallas

    kernel = functools.partial(_nonneg_kernel, bound=bound, pedestal=pedestal)

    out2d = pl.pallas_call(
        kernel,
        out_shape=jax.ShapeDtypeStruct((rows, lanes), dtype),
        grid=grid,
        in_specs=[pl.BlockSpec((br, lanes), lambda i: (i, 0))],
        out_specs=pl.BlockSpec((br, lanes), lambda i: (i, 0)),
        compiler_params=pltpu.CompilerParams(
            dimension_semantics=("parallel",)),   # shards across v7x's 2 TCs
    )(x2d)

    out_flat = out2d.reshape(-1)
    if pad:
        out_flat = out_flat[:total]
    return out_flat.reshape(orig_shape)


def gdn_reparam(beta, gamma, *, beta_min=1e-6, reparam_offset=2.0 ** (-18)):
    """Fused reparametrization for one GDN layer (beta (C,), gamma (C,C)).

    One pallas_call, one grid step, no host-side pad/cast/slice copies.
    """
    pedestal = float(reparam_offset) ** 2
    beta_bound = (float(beta_min) + pedestal) ** 0.5
    gamma_bound = pedestal ** 0.5           # gamma path uses minimum=0

    C = beta.shape[0]
    assert gamma.shape == (C, C), "gamma must be (C, C) to match beta (C,)"

    kernel = functools.partial(_gdn_reparam_kernel, beta_bound=beta_bound,
                               gamma_bound=gamma_bound, pedestal=pedestal)

    out_beta2d, out_gamma = pl.pallas_call(
        kernel,
        out_shape=(jax.ShapeDtypeStruct((1, C), beta.dtype),
                   jax.ShapeDtypeStruct((C, C), gamma.dtype)),
    )(beta.reshape(1, C), gamma)

    return out_beta2d.reshape(C), out_gamma


# ---------------------------------------------------------------------------
# Pure-JAX reference
# ---------------------------------------------------------------------------
def _reference(x, *, minimum=0.0, reparam_offset=2.0 ** (-18)):
    pedestal = float(reparam_offset) ** 2
    bound = (float(minimum) + pedestal) ** 0.5
    y = jnp.maximum(x.astype(jnp.float32), bound)
    return y * y - pedestal


if __name__ == "__main__":
    key = jax.random.PRNGKey(0)
    k_beta, k_gamma, k_odd, k_bf16 = jax.random.split(key, 4)

    C = 128  # in_channels of the GDN layers inside Decoder(N=128)
    reparam_offset = 2.0 ** (-18)
    pedestal = reparam_offset ** 2

    # Parameters shaped like what GDN feeds through this module after its
    # init-time reparametrization, plus deterministic noise so clipping fires.
    beta = jnp.sqrt(jnp.ones((C,), jnp.float32) + pedestal)
    gamma = jnp.sqrt(jnp.maximum(0.1 * jnp.eye(C, dtype=jnp.float32) + pedestal,
                                 pedestal))
    beta = beta + 0.01 * jax.random.normal(k_beta, (C,), jnp.float32)
    gamma = gamma + 0.01 * jax.random.normal(k_gamma, (C, C), jnp.float32)

    # --- standalone path (beta uses minimum=1e-6, gamma uses minimum=0) -----
    out_beta = non_negative_parametrizer(beta, minimum=1e-6)
    out_gamma = non_negative_parametrizer(gamma, minimum=0.0)

    # --- fused path: one pallas_call for both GDN parameters ----------------
    fused_beta, fused_gamma = gdn_reparam(beta, gamma, beta_min=1e-6)

    # --- unaligned-shape path (exercises the pad branch) --------------------
    x_odd = 0.05 * jax.random.normal(k_odd, (3, 5, 7), jnp.float32)
    out_odd = non_negative_parametrizer(x_odd, minimum=0.0)

    # --- native-dtype path (bf16 in, bf16 out, f32 math in-register) --------
    x_bf16 = (0.05 * jax.random.normal(k_bf16, (2, 4, 16, 16), jnp.float32)
              ).astype(jnp.bfloat16)
    out_bf16 = non_negative_parametrizer(x_bf16, minimum=0.0)

    jax.block_until_ready(
        (out_beta, out_gamma, fused_beta, fused_gamma, out_odd, out_bf16))

    ref_beta = _reference(beta, minimum=1e-6)
    ref_gamma = _reference(gamma, minimum=0.0)
    ref_odd = _reference(x_odd, minimum=0.0)
    ref_bf16 = _reference(x_bf16, minimum=0.0)

    assert out_beta.dtype == beta.dtype and out_bf16.dtype == x_bf16.dtype
    assert jnp.allclose(out_beta, ref_beta, atol=1e-6, rtol=1e-6)
    assert jnp.allclose(out_gamma, ref_gamma, atol=1e-6, rtol=1e-6)
    assert jnp.allclose(fused_beta, ref_beta, atol=1e-6, rtol=1e-6)
    assert jnp.allclose(fused_gamma, ref_gamma, atol=1e-6, rtol=1e-6)
    assert jnp.allclose(out_odd, ref_odd, atol=1e-6, rtol=1e-6)
    # bf16 output only differs from the f32 reference by the final downcast.
    assert jnp.allclose(out_bf16.astype(jnp.float32), ref_bf16,
                        atol=1e-4, rtol=2e-2)

    print("KERNEL_OK")
</pallas_src>

<mosaic_0001>
module attributes {stable_mosaic.version = 11 : i64} {
  func.func @_nonneg_kernel(%arg0: i32, %arg1: memref<1x128xf32, #tpu.memory_space<vmem>>, %arg2: memref<1x128xf32, #tpu.memory_space<vmem>>) attributes {dimension_semantics = [#tpu.dimension_semantics<parallel>], iteration_bounds = array<i64: 1>, scalar_prefetch = 0 : i64, scratch_operands = 0 : i64, tpu.core_type = #tpu.core_type<tc>, window_params = [{transform_indices = @transform_0, window_bounds = array<i64: 1, 128>}, {transform_indices = @transform_1, window_bounds = array<i64: 1, 128>}]} {
    %c0 = arith.constant 0 : index
    %c0_0 = arith.constant 0 : index
    %0 = vector.load %arg1[%c0, %c0_0] : memref<1x128xf32, #tpu.memory_space<vmem>>, vector<1x128xf32>
    %cst = arith.constant 0.00100000727 : f32
    %1 = vector.broadcast %cst : f32 to vector<1x128xf32>
    %2 = arith.maximumf %0, %1 : vector<1x128xf32>
    %3 = arith.mulf %2, %2 : vector<1x128xf32>
    %cst_1 = arith.constant 1.45519152E-11 : f32
    %4 = vector.broadcast %cst_1 : f32 to vector<1x128xf32>
    %5 = arith.subf %3, %4 : vector<1x128xf32>
    %c0_2 = arith.constant 0 : index
    %c0_3 = arith.constant 0 : index
    %6 = vector.load %arg2[%c0_2, %c0_3] : memref<1x128xf32, #tpu.memory_space<vmem>>, vector<1x128xf32>
    tpu.vector_store %arg2[%c0_2, %c0_3], %5 {strides = array<i32>} : memref<1x128xf32, #tpu.memory_space<vmem>>, vector<1x128xf32>,
    return
  }
  func.func @transform_0(%arg0: i32) -> (i32, i32) {
    %c0_i32 = arith.constant 0 : i32
    %c0_i32_0 = arith.constant 0 : i32
    return %arg0, %c0_i32 : i32, i32
  }
  func.func @transform_1(%arg0: i32) -> (i32, i32) {
    %c0_i32 = arith.constant 0 : i32
    %c0_i32_0 = arith.constant 0 : i32
    return %arg0, %c0_i32 : i32, i32
  }
}

</mosaic_0001>

<llo_original>
// kernel: tpu_custom_call.1
$region0: #{tpu_custom_call.1}
  #allocation0 [shape = 'u32[]', space=smem, size = 0x4, offset = 0x4, fixed_abs, tag = 'smem constant byte address 0x4 - core index']
  #allocation1 [shape = 'u32[144,128]{1,0:T(1,128)}', space=vmem, size = 0x12000, scoped, tag = 'internal scratch']
  %s0 = inlined_call_operand.hbm [shape: f32[1,128], index: 0, kind: input, shape index: {}]
  %s1 = inlined_call_operand.hbm [shape: f32[1,128], index: 1, kind: output, shape index: {}]
  %s2 = sld [smem:[#allocation0]]
  $region18: #{tpu_custom_call.1} parent=0
    _
  %s4 = ssub.s32 1, %s2
  %s5 = scalar_select 0, %s4, %s2
  $region1: #{tpu_custom_call.1} parent=0
    #allocation2 [shape = 'u8[512]{0}', space=vmem, size = 0x400, scoped, tag = 'input window, operand 0, single buffered']
    #allocation3 [shape = 's32[1]{0}', space=sflag, size = 0x4, scoped, tag = 'scoped memory for tpu_custom_call.1']
    #allocation4 [shape = 's32[1]{0}', space=sflag, size = 0x4, scoped, tag = 'scoped memory for tpu_custom_call.1']
    #allocation5 [shape = 'u8[512]{0}', space=vmem, size = 0x400, scoped, tag = 'output window, operand 0, single buffered']
    %6 = vsyncpa [#allocation3], 0
    %7 = vsyncpa [#allocation4], 0
    // Predicated region
    $region2: #{tpu_custom_call.1} parent=1 // pred_check
      _
    $region3: #{tpu_custom_call.1} parent=1 // pred_check_branch
      %9 = sbr.rel (0) target = $region5
    $region4: #{tpu_custom_call.1} parent=1 // pred_region
      %s11 = ssub.s32 16, 16
      %12 = vsyncadd [#allocation3], %s11
      %s14 = sshll.u32 [#allocation2], 4
      %s15 = int_to_ptr.vmem [resolvable:$true] %s14
      %17 = dma.hbm_to_vmem [thread:$0]  %s0, 16, %s15, [#allocation3]
    $region5: #{tpu_custom_call.1} parent=1 // pred_fallthru
      _
    // Predicated region
    $region6: #{tpu_custom_call.1} parent=1 // pred_check
      _
    $region7: #{tpu_custom_call.1} parent=1 // pred_check_branch
      %19 = sbr.rel (0) target = $region9
    $region8: #{tpu_custom_call.1} parent=1 // pred_region
      %20 = dma.done [#allocation3], 16
    $region9: #{tpu_custom_call.1} parent=1 // pred_fallthru
      _
    %v21 = vld [vmem:[#allocation2] sm:$0x1]
    %v22 = vmax.f32 %v21, 0.0010000073
    %v23 = vmul.f32 %v22, %v22
    %v24 = vsub.f32 %v23, 1.4551915e-11
    %25 = vst [vmem:[#allocation5] sm:$0x1] %v24
    // Predicated region
    $region10: #{tpu_custom_call.1} parent=1 // pred_check
      _
    $region11: #{tpu_custom_call.1} parent=1 // pred_check_branch
      %27 = sbr.rel (0) target = $region13
    $region12: #{tpu_custom_call.1} parent=1 // pred_region
      %s29 = ssub.s32 16, 16
      %30 = vsyncadd [#allocation4], %s29
      %s32 = sshll.u32 [#allocation5], 4
      %s33 = int_to_ptr.vmem [resolvable:$true] %s32
      %35 = dma.vmem_to_hbm [thread:$0]  %s33, 16, %s1, [#allocation4]
    $region13: #{tpu_custom_call.1} parent=1 // pred_fallthru
      _
    // Predicated region
    $region14: #{tpu_custom_call.1} parent=1 // pred_check
      _
    $region15: #{tpu_custom_call.1} parent=1 // pred_check_branch
      %37 = sbr.rel (0) target = $region17
    $region16: #{tpu_custom_call.1} parent=1 // pred_region
      %38 = dma.done [#allocation4], 16
    $region17: #{tpu_custom_call.1} parent=1 // pred_fallthru
      _
    %39 = vsyncpa [#allocation3], 1
    %40 = vsyncpa [#allocation4], 1

</llo_original>
